<compile_context>
chip_gen: v6e
topology: v6e:2x2x1
jax: 0.10.0
libtpu: 0.0.40
codegen_flags: <defaults>
</compile_context>

<pallas_src>
import jax
import jax.numpy as jnp
from jax.experimental import pallas as pl
from jax.experimental.pallas import tpu as pltpu

_LANE = 128          # TPU lane width
_CHUNK = 2048        # lanes per inner-loop step (multiple of _LANE)
_MAX_TILE = 131072   # max lanes per grid step (in block 512 KiB, out block 4 MiB)


def _round_up(x, m):
    return ((x + m - 1) // m) * m


def reference_forward(x, weight, bias):
    """Pure-JAX reference matching the PyTorch module semantics."""
    y = x @ weight.T + bias
    first = y[:, 0:1]
    rest = jax.nn.softmax(y[:, 1:8], axis=1) * first
    return jnp.concatenate([first, rest], axis=1)


def mymodel_kernel(x_ref, w_ref, b_ref, out_ref):
    # x_ref: (1, T)  batch on lanes
    # w_ref: (8, 1)  features on sublanes
    # b_ref: (8, 1)
    # out_ref: (8, T)
    w = w_ref[...]                                   # (8, 1)
    b = b_ref[...]                                   # (8, 1)
    n_chunks = out_ref.shape[1] // _CHUNK            # static Python int

    def body(c, carry):
        off = pl.multiple_of(c * _CHUNK, _CHUNK)
        x = x_ref[:, pl.ds(off, _CHUNK)]             # (1, C)
        # TODO(synk): a stride-0 sublane-broadcast load
        # (x_ref[pl.ds(0, 8, stride=0), ...]) would move this broadcast off
        # the XLU; kept as plain jnp broadcasting for lowering robustness.
        y = w * x + b                                # (8, C) rank-1 linear, VPU

        first = y[0:1, :]                            # (1, C)
        rest = y[1:8, :]                             # (7, C)

        # Stable softmax over the 7 feature rows (sublane axis), fused with
        # the "* first" scaling:  out_rest = e * (first / sum(e)).
        m = jnp.max(rest, axis=0, keepdims=True)     # (1, C)
        e = jnp.exp(rest - m)                        # (7, C)
        s = jnp.sum(e, axis=0, keepdims=True)        # (1, C)
        r = pl.reciprocal(s, approx=True)            # EUP slot
        r = r * (2.0 - s * r)                        # one Newton step -> f32-exact
        scale = first * r                            # (1, C)

        out_ref[0:1, pl.ds(off, _CHUNK)] = first.astype(out_ref.dtype)
        out_ref[1:8, pl.ds(off, _CHUNK)] = (e * scale).astype(out_ref.dtype)
        return carry

    jax.lax.fori_loop(0, n_chunks, body, 0)


def _choose_tile(n, max_tile):
    t = min(max_tile, _round_up(n, _CHUNK))
    # For large batches keep >= 8 grid steps (balances the two v7x
    # TensorCores and keeps the DMA pipeline deep) while keeping each step's
    # HBM traffic >= ~1 MiB so the ~0.35 us per-step overhead stays amortized.
    min_tile = 16 * _CHUNK                           # 32768 lanes
    if n >= 8 * min_tile:
        t = min(t, max(min_tile, _round_up(n // 8, _CHUNK)))
    return max(_CHUNK, (t // _CHUNK) * _CHUNK)


def mymodel_forward(x, weight, bias, *, max_tile=_MAX_TILE,
                    small_batch_threshold=16384, feature_major=False):
    """x: (N, 1), weight: (8, 1) (nn.Linear layout), bias: (8,).

    Returns (N, 8) float32 matching the PyTorch module (or (8, N) if
    feature_major=True, which skips the final transpose).
    """
    n = x.shape[0]

    # Tiny batches: padding + pallas_call fixed cost dominates; use fused XLA.
    if n < small_batch_threshold:
        out = reference_forward(x.astype(jnp.float32),
                                weight.astype(jnp.float32),
                                bias.astype(jnp.float32))
        return out.T if feature_major else out

    tile = _choose_tile(n, max_tile)
    n_pad = _round_up(n, tile)

    # (N, 1) -> (1, N) is a pure reshape; pad only the tail (no zeros+scatter).
    xt = jnp.pad(x.astype(jnp.float32).reshape(1, n), ((0, 0), (0, n_pad - n)))
    w = weight.astype(jnp.float32).reshape(8, 1)
    b = bias.astype(jnp.float32).reshape(8, 1)

    out_t = pl.pallas_call(
        mymodel_kernel,
        out_shape=jax.ShapeDtypeStruct((8, n_pad), jnp.float32),
        grid=(pl.cdiv(n_pad, tile),),
        in_specs=[
            pl.BlockSpec((1, tile), lambda i: (0, i)),   # x tile (streamed)
            pl.BlockSpec((8, 1), lambda i: (0, 0)),      # weight (resident)
            pl.BlockSpec((8, 1), lambda i: (0, 0)),      # bias   (resident)
        ],
        out_specs=pl.BlockSpec((8, tile), lambda i: (0, i)),
        compiler_params=pltpu.CompilerParams(
            # TODO(synk): on v7x, verify in a profile that the "parallel"
            # batch axis actually spans both TensorCores; if not, try
            # CORE_PARALLEL semantics or an explicit leading core axis.
            dimension_semantics=("parallel",),
            vmem_limit_bytes=32 * 1024 * 1024,
        ),
    )(xt, w, b)                                          # (8, n_pad)

    if feature_major:
        return out_t[:, :n]
    # PyTorch layout (N, 8).  Memory-bound consumers should prefer
    # feature_major=True and keep the (8, N) layout downstream.
    return out_t[:, :n].T


if __name__ == "__main__":
    key = jax.random.PRNGKey(0)
    k_x, k_w, k_b = jax.random.split(key, 3)

    # nn.Linear(1, 8)-shaped parameters (uniform(-1/sqrt(fan_in), ...), fan_in=1).
    bound = 1.0
    weight = jax.random.uniform(k_w, (8, 1), minval=-bound, maxval=bound,
                                dtype=jnp.float32)
    bias = jax.random.uniform(k_b, (8,), minval=-bound, maxval=bound,
                              dtype=jnp.float32)

    # Small batch, forced through the Pallas path (threshold=0).
    batch = 8
    x = jax.random.normal(k_x, (batch, 1), dtype=jnp.float32)
    out = jax.block_until_ready(
        mymodel_forward(x, weight, bias, small_batch_threshold=0))
    ref = reference_forward(x, weight, bias)
    assert out.shape == (batch, 8)
    assert jnp.allclose(out, ref, atol=1e-5, rtol=1e-5), "small-batch mismatch"

    # Non-tile-aligned batch spanning multiple inner chunks, Pallas path.
    batch2 = 5000
    x2 = jax.random.normal(k_x, (batch2, 1), dtype=jnp.float32)
    out2 = jax.block_until_ready(
        mymodel_forward(x2, weight, bias, small_batch_threshold=0))
    ref2 = reference_forward(x2, weight, bias)
    assert out2.shape == (batch2, 8)
    assert jnp.allclose(out2, ref2, atol=1e-5, rtol=1e-5), "large-batch mismatch"

    # Default path (fast XLA route for tiny N) must also match.
    out3 = jax.block_until_ready(mymodel_forward(x, weight, bias))
    assert jnp.allclose(out3, ref, atol=1e-5, rtol=1e-5), "fast-path mismatch"

    print("KERNEL_OK")
</pallas_src>

<mosaic_0001>
module attributes {stable_mosaic.version = 11 : i64} {
  func.func @mymodel_kernel(%arg0: i32, %arg1: memref<1x2048xf32, #tpu.memory_space<vmem>>, %arg2: memref<8x1xf32, #tpu.memory_space<vmem>>, %arg3: memref<8x1xf32, #tpu.memory_space<vmem>>, %arg4: memref<8x2048xf32, #tpu.memory_space<vmem>>) attributes {dimension_semantics = [#tpu.dimension_semantics<parallel>], iteration_bounds = array<i64: 1>, scalar_prefetch = 0 : i64, scratch_operands = 0 : i64, tpu.core_type = #tpu.core_type<tc>, window_params = [{transform_indices = @transform_0, window_bounds = array<i64: 1, 2048>}, {pipeline_mode = #tpu.pipeline_mode<synchronous>, transform_indices = @transform_1, window_bounds = array<i64: 8, 1>}, {pipeline_mode = #tpu.pipeline_mode<synchronous>, transform_indices = @transform_2, window_bounds = array<i64: 8, 1>}, {transform_indices = @transform_3, window_bounds = array<i64: 8, 2048>}]} {
    %c0 = arith.constant 0 : index
    %c0_0 = arith.constant 0 : index
    %0 = vector.load %arg2[%c0, %c0_0] : memref<8x1xf32, #tpu.memory_space<vmem>>, vector<8x1xf32>
    %c0_1 = arith.constant 0 : index
    %c0_2 = arith.constant 0 : index
    %1 = vector.load %arg3[%c0_1, %c0_2] : memref<8x1xf32, #tpu.memory_space<vmem>>, vector<8x1xf32>
    %c0_i32 = arith.constant 0 : i32
    %c2048_i32 = arith.constant 2048 : i32
    %2 = arith.muli %c0_i32, %c2048_i32 : i32
    %3 = tpu.assume_multiple %2, 2048 : i32
    %c0_3 = arith.constant 0 : index
    %4 = arith.index_cast %3 : i32 to index
    %5 = vector.load %arg1[%c0_3, %4] : memref<1x2048xf32, #tpu.memory_space<vmem>>, vector<1x2048xf32>
    %6 = vector.broadcast %0 : vector<8x1xf32> to vector<8x2048xf32>
    %7 = vector.broadcast %5 : vector<1x2048xf32> to vector<8x2048xf32>
    %8 = arith.mulf %6, %7 : vector<8x2048xf32>
    %9 = vector.broadcast %1 : vector<8x1xf32> to vector<8x2048xf32>
    %10 = arith.addf %8, %9 : vector<8x2048xf32>
    %11 = vector.extract_strided_slice %10 {offsets = [0, 0], sizes = [1, 2048], strides = [1, 1]} : vector<8x2048xf32> to vector<1x2048xf32>
    %12 = vector.extract_strided_slice %10 {offsets = [1, 0], sizes = [7, 2048], strides = [1, 1]} : vector<8x2048xf32> to vector<7x2048xf32>
    %cst = arith.constant dense<0xFF800000> : vector<2048xf32>
    %13 = vector.multi_reduction <maximumf>, %12, %cst [0] : vector<7x2048xf32> to vector<2048xf32>
    %14 = vector.shape_cast %13 : vector<2048xf32> to vector<1x2048xf32>
    %15 = vector.broadcast %14 : vector<1x2048xf32> to vector<7x2048xf32>
    %16 = arith.subf %12, %15 : vector<7x2048xf32>
    %17 = math.exp %16 : vector<7x2048xf32>
    %cst_4 = arith.constant dense<0.000000e+00> : vector<2048xf32>
    %18 = vector.multi_reduction <add>, %17, %cst_4 [0] : vector<7x2048xf32> to vector<2048xf32>
    %19 = vector.shape_cast %18 : vector<2048xf32> to vector<1x2048xf32>
    %20 = tpu.reciprocal %19 {approx = true} : vector<1x2048xf32> -> vector<1x2048xf32>
    %21 = arith.mulf %19, %20 : vector<1x2048xf32>
    %cst_5 = arith.constant 2.000000e+00 : f32
    %22 = vector.broadcast %cst_5 : f32 to vector<1x2048xf32>
    %23 = arith.subf %22, %21 : vector<1x2048xf32>
    %24 = arith.mulf %20, %23 : vector<1x2048xf32>
    %25 = arith.mulf %11, %24 : vector<1x2048xf32>
    %c0_6 = arith.constant 0 : index
    %26 = arith.index_cast %3 : i32 to index
    %27 = vector.load %arg4[%c0_6, %26] : memref<8x2048xf32, #tpu.memory_space<vmem>>, vector<1x2048xf32>
    tpu.vector_store %arg4[%c0_6, %26], %11 {strides = array<i32>} : memref<8x2048xf32, #tpu.memory_space<vmem>>, vector<1x2048xf32>,
    %28 = vector.broadcast %25 : vector<1x2048xf32> to vector<7x2048xf32>
    %29 = arith.mulf %17, %28 : vector<7x2048xf32>
    %c1 = arith.constant 1 : index
    %30 = arith.index_cast %3 : i32 to index
    %31 = vector.load %arg4[%c1, %30] : memref<8x2048xf32, #tpu.memory_space<vmem>>, vector<7x2048xf32>
    tpu.vector_store %arg4[%c1, %30], %29 {strides = array<i32>} : memref<8x2048xf32, #tpu.memory_space<vmem>>, vector<7x2048xf32>,
    %c1_i32 = arith.constant 1 : i32
    return
  }
  func.func @transform_0(%arg0: i32) -> (i32, i32) {
    %c0_i32 = arith.constant 0 : i32
    %c0_i32_0 = arith.constant 0 : i32
    return %c0_i32, %arg0 : i32, i32
  }
  func.func @transform_1(%arg0: i32) -> (i32, i32) {
    %c0_i32 = arith.constant 0 : i32
    %c0_i32_0 = arith.constant 0 : i32
    %c0_i32_1 = arith.constant 0 : i32
    return %c0_i32, %c0_i32_0 : i32, i32
  }
  func.func @transform_2(%arg0: i32) -> (i32, i32) {
    %c0_i32 = arith.constant 0 : i32
    %c0_i32_0 = arith.constant 0 : i32
    %c0_i32_1 = arith.constant 0 : i32
    return %c0_i32, %c0_i32_0 : i32, i32
  }
  func.func @transform_3(%arg0: i32) -> (i32, i32) {
    %c0_i32 = arith.constant 0 : i32
    %c0_i32_0 = arith.constant 0 : i32
    return %c0_i32, %arg0 : i32, i32
  }
}

</mosaic_0001>

<llo_original>
// kernel: tpu_custom_call.1
$region0: #{tpu_custom_call.1}
  #allocation0 [shape = 'u32[]', space=smem, size = 0x4, offset = 0x4, fixed_abs, tag = 'smem constant byte address 0x4 - core index']
  #allocation1 [shape = 'u32[144,128]{1,0:T(1,128)}', space=vmem, size = 0x12000, scoped, tag = 'internal scratch']
  %s0 = inlined_call_operand.vmem [shape: f32[1,2048], index: 0, kind: input, shape index: {}]
  %s1 = inlined_call_operand.vmem [shape: f32[8,1], index: 1, kind: input, shape index: {}]
  %s2 = inlined_call_operand.vmem [shape: f32[8,1], index: 2, kind: input, shape index: {}]
  %s3 = inlined_call_operand.hbm [shape: f32[8,2048], index: 3, kind: output, shape index: {}]
  %s4 = sld [smem:[#allocation0]]
  $region22: #{tpu_custom_call.1} parent=0
    _
  %s6 = ssub.s32 1, %s4
  %s7 = scalar_select 0, %s6, %s4
  $region1: #{tpu_custom_call.1} parent=0
    #allocation2 [shape = 'u8[65536]{0}', space=vmem, size = 0x10000, scoped, tag = 'output window, operand 0, single buffered']
    #allocation3 [shape = 's32[1]{0}', space=sflag, size = 0x4, scoped, tag = 'scoped memory for tpu_custom_call.1']
    %8 = vsyncpa [#allocation3], 0
    // Predicated region
    $region2: #{tpu_custom_call.1} parent=1 // pred_check
      _
    $region3: #{tpu_custom_call.1} parent=1 // pred_check_branch
      %10 = sbr.rel (0) target = $region5
    $region4: #{tpu_custom_call.1} parent=1 // pred_region
      _
    $region5: #{tpu_custom_call.1} parent=1 // pred_fallthru
      _
    // Predicated region
    $region6: #{tpu_custom_call.1} parent=1 // pred_check
      _
    $region7: #{tpu_custom_call.1} parent=1 // pred_check_branch
      %12 = sbr.rel (0) target = $region9
    $region8: #{tpu_custom_call.1} parent=1 // pred_region
      _
    $region9: #{tpu_custom_call.1} parent=1 // pred_fallthru
      _
    // Predicated region
    $region10: #{tpu_custom_call.1} parent=1 // pred_check
      _
    $region11: #{tpu_custom_call.1} parent=1 // pred_check_branch
      %14 = sbr.rel (0) target = $region13
    $region12: #{tpu_custom_call.1} parent=1 // pred_region
      _
    $region13: #{tpu_custom_call.1} parent=1 // pred_fallthru
      _
    %v15 = vld [vmem:[%s1] sm:$0xff]
    %v16 = vld [vmem:[%s2] sm:$0xff]
    %v17 = vld [vmem:[%s0] sm:$0xff]
    %v18 = vld [vmem:[%s0 + $0x8] sm:$0xff]
    %20 = vset.pattern.permute.xlu0 0
    %21 = vperm.xlu0 %20, %v15
    %v22 = vpop.permute.xlu0 %21
    %v26 = vlaneseq
    %v27 = vshrl.u32 %v26, 7
    %v28 = vsub.s32 0, %v27
    %v29 = vrot.slane %v17, %v28
    %v30 = vlaneseq
    %v31 = vshrl.u32 %v30, 7
    %v32 = vsub.s32 1, %v31
    %v33 = vrot.slane %v17, %v32
    %v34 = vlaneseq
    %v35 = vshrl.u32 %v34, 7
    %v36 = vsub.s32 2, %v35
    %v37 = vrot.slane %v17, %v36
    %v38 = vlaneseq
    %v39 = vshrl.u32 %v38, 7
    %v40 = vsub.s32 3, %v39
    %v41 = vrot.slane %v17, %v40
    %v42 = vlaneseq
    %v43 = vshrl.u32 %v42, 7
    %v44 = vsub.s32 4, %v43
    %v45 = vrot.slane %v17, %v44
    %v46 = vlaneseq
    %v47 = vshrl.u32 %v46, 7
    %v48 = vsub.s32 5, %v47
    %v49 = vrot.slane %v17, %v48
    %v50 = vlaneseq
    %v51 = vshrl.u32 %v50, 7
    %v52 = vsub.s32 6, %v51
    %v53 = vrot.slane %v17, %v52
    %v54 = vlaneseq
    %v55 = vshrl.u32 %v54, 7
    %v56 = vsub.s32 7, %v55
    %v57 = vrot.slane %v17, %v56
    %v58 = vlaneseq
    %v59 = vshrl.u32 %v58, 7
    %v60 = vsub.s32 0, %v59
    %v61 = vrot.slane %v18, %v60
    %v62 = vlaneseq
    %v63 = vshrl.u32 %v62, 7
    %v64 = vsub.s32 1, %v63
    %v65 = vrot.slane %v18, %v64
    %v66 = vlaneseq
    %v67 = vshrl.u32 %v66, 7
    %v68 = vsub.s32 2, %v67
    %v69 = vrot.slane %v18, %v68
    %v70 = vlaneseq
    %v71 = vshrl.u32 %v70, 7
    %v72 = vsub.s32 3, %v71
    %v73 = vrot.slane %v18, %v72
    %v74 = vlaneseq
    %v75 = vshrl.u32 %v74, 7
    %v76 = vsub.s32 4, %v75
    %v77 = vrot.slane %v18, %v76
    %v78 = vlaneseq
    %v79 = vshrl.u32 %v78, 7
    %v80 = vsub.s32 5, %v79
    %v81 = vrot.slane %v18, %v80
    %v82 = vlaneseq
    %v83 = vshrl.u32 %v82, 7
    %v84 = vsub.s32 6, %v83
    %v85 = vrot.slane %v18, %v84
    %v86 = vlaneseq
    %v87 = vshrl.u32 %v86, 7
    %v88 = vsub.s32 7, %v87
    %v89 = vrot.slane %v18, %v88
    %v106 = vmul.f32 %v22, %v29
    %v107 = vmul.f32 %v22, %v33
    %v108 = vmul.f32 %v22, %v37
    %v109 = vmul.f32 %v22, %v41
    %v110 = vmul.f32 %v22, %v45
    %v111 = vmul.f32 %v22, %v49
    %v112 = vmul.f32 %v22, %v53
    %v113 = vmul.f32 %v22, %v57
    %v114 = vmul.f32 %v22, %v61
    %v115 = vmul.f32 %v22, %v65
    %v116 = vmul.f32 %v22, %v69
    %v117 = vmul.f32 %v22, %v73
    %v118 = vmul.f32 %v22, %v77
    %v119 = vmul.f32 %v22, %v81
    %v120 = vmul.f32 %v22, %v85
    %v121 = vmul.f32 %v22, %v89
    %123 = vset.pattern.permute.xlu0 0
    %124 = vperm.xlu0 %123, %v16
    %v125 = vpop.permute.xlu0 %124
    %v127 = vadd.f32 %v106, %v125
    %v128 = vadd.f32 %v107, %v125
    %v129 = vadd.f32 %v108, %v125
    %v130 = vadd.f32 %v109, %v125
    %v131 = vadd.f32 %v110, %v125
    %v132 = vadd.f32 %v111, %v125
    %v133 = vadd.f32 %v112, %v125
    %v134 = vadd.f32 %v113, %v125
    %v135 = vadd.f32 %v114, %v125
    %v136 = vadd.f32 %v115, %v125
    %v137 = vadd.f32 %v116, %v125
    %v138 = vadd.f32 %v117, %v125
    %v139 = vadd.f32 %v118, %v125
    %v140 = vadd.f32 %v119, %v125
    %v141 = vadd.f32 %v120, %v125
    %v142 = vadd.f32 %v121, %v125
    %vm143 = vcmask 1047553
    %v144 = vsel %vm143, %v127, -inf
    %v145 = vrot.slane %v144, 4
    %v146 = vmax.f32 %v144, %v145
    %v147 = vrot.slane %v146, 2
    %v148 = vmax.f32 %v146, %v147
    %v149 = vrot.slane %v148, 1
    %v150 = vmax.f32 %v148, %v149
    %v151 = vsel %vm143, %v128, -inf
    %v152 = vrot.slane %v151, 4
    %v153 = vmax.f32 %v151, %v152
    %v154 = vrot.slane %v153, 2
    %v155 = vmax.f32 %v153, %v154
    %v156 = vrot.slane %v155, 1
    %v157 = vmax.f32 %v155, %v156
    %v158 = vsel %vm143, %v129, -inf
    %v159 = vrot.slane %v158, 4
    %v160 = vmax.f32 %v158, %v159
    %v161 = vrot.slane %v160, 2
    %v162 = vmax.f32 %v160, %v161
    %v163 = vrot.slane %v162, 1
    %v164 = vmax.f32 %v162, %v163
    %v165 = vsel %vm143, %v130, -inf
    %v166 = vrot.slane %v165, 4
    %v167 = vmax.f32 %v165, %v166
    %v168 = vrot.slane %v167, 2
    %v169 = vmax.f32 %v167, %v168
    %v170 = vrot.slane %v169, 1
    %v171 = vmax.f32 %v169, %v170
    %v172 = vsel %vm143, %v131, -inf
    %v173 = vrot.slane %v172, 4
    %v174 = vmax.f32 %v172, %v173
    %v175 = vrot.slane %v174, 2
    %v176 = vmax.f32 %v174, %v175
    %v177 = vrot.slane %v176, 1
    %v178 = vmax.f32 %v176, %v177
    %v179 = vsel %vm143, %v132, -inf
    %v180 = vrot.slane %v179, 4
    %v181 = vmax.f32 %v179, %v180
    %v182 = vrot.slane %v181, 2
    %v183 = vmax.f32 %v181, %v182
    %v184 = vrot.slane %v183, 1
    %v185 = vmax.f32 %v183, %v184
    %v186 = vsel %vm143, %v133, -inf
    %v187 = vrot.slane %v186, 4
    %v188 = vmax.f32 %v186, %v187
    %v189 = vrot.slane %v188, 2
    %v190 = vmax.f32 %v188, %v189
    %v191 = vrot.slane %v190, 1
    %v192 = vmax.f32 %v190, %v191
    %v193 = vsel %vm143, %v134, -inf
    %v194 = vrot.slane %v193, 4
    %v195 = vmax.f32 %v193, %v194
    %v196 = vrot.slane %v195, 2
    %v197 = vmax.f32 %v195, %v196
    %v198 = vrot.slane %v197, 1
    %v199 = vmax.f32 %v197, %v198
    %v200 = vsel %vm143, %v135, -inf
    %v201 = vrot.slane %v200, 4
    %v202 = vmax.f32 %v200, %v201
    %v203 = vrot.slane %v202, 2
    %v204 = vmax.f32 %v202, %v203
    %v205 = vrot.slane %v204, 1
    %v206 = vmax.f32 %v204, %v205
    %v207 = vsel %vm143, %v136, -inf
    %v208 = vrot.slane %v207, 4
    %v209 = vmax.f32 %v207, %v208
    %v210 = vrot.slane %v209, 2
    %v211 = vmax.f32 %v209, %v210
    %v212 = vrot.slane %v211, 1
    %v213 = vmax.f32 %v211, %v212
    %v214 = vsel %vm143, %v137, -inf
    %v215 = vrot.slane %v214, 4
    %v216 = vmax.f32 %v214, %v215
    %v217 = vrot.slane %v216, 2
    %v218 = vmax.f32 %v216, %v217
    %v219 = vrot.slane %v218, 1
    %v220 = vmax.f32 %v218, %v219
    %v221 = vsel %vm143, %v138, -inf
    %v222 = vrot.slane %v221, 4
    %v223 = vmax.f32 %v221, %v222
    %v224 = vrot.slane %v223, 2
    %v225 = vmax.f32 %v223, %v224
    %v226 = vrot.slane %v225, 1
    %v227 = vmax.f32 %v225, %v226
    %v228 = vsel %vm143, %v139, -inf
    %v229 = vrot.slane %v228, 4
    %v230 = vmax.f32 %v228, %v229
    %v231 = vrot.slane %v230, 2
    %v232 = vmax.f32 %v230, %v231
    %v233 = vrot.slane %v232, 1
    %v234 = vmax.f32 %v232, %v233
    %v235 = vsel %vm143, %v140, -inf
    %v236 = vrot.slane %v235, 4
    %v237 = vmax.f32 %v235, %v236
    %v238 = vrot.slane %v237, 2
    %v239 = vmax.f32 %v237, %v238
    %v240 = vrot.slane %v239, 1
    %v241 = vmax.f32 %v239, %v240
    %v242 = vsel %vm143, %v141, -inf
    %v243 = vrot.slane %v242, 4
    %v244 = vmax.f32 %v242, %v243
    %v245 = vrot.slane %v244, 2
    %v246 = vmax.f32 %v244, %v245
    %v247 = vrot.slane %v246, 1
    %v248 = vmax.f32 %v246, %v247
    %v249 = vsel %vm143, %v142, -inf
    %v250 = vrot.slane %v249, 4
    %v251 = vmax.f32 %v249, %v250
    %v252 = vrot.slane %v251, 2
    %v253 = vmax.f32 %v251, %v252
    %v254 = vrot.slane %v253, 1
    %v255 = vmax.f32 %v253, %v254
    %v256 = vsub.f32 %v127, %v150
    %v257 = vsub.f32 %v128, %v157
    %v258 = vsub.f32 %v129, %v164
    %v259 = vsub.f32 %v130, %v171
    %v260 = vsub.f32 %v131, %v178
    %v261 = vsub.f32 %v132, %v185
    %v262 = vsub.f32 %v133, %v192
    %v263 = vsub.f32 %v134, %v199
    %v264 = vsub.f32 %v135, %v206
    %v265 = vsub.f32 %v136, %v213
    %v266 = vsub.f32 %v137, %v220
    %v267 = vsub.f32 %v138, %v227
    %v268 = vsub.f32 %v139, %v234
    %v269 = vsub.f32 %v140, %v241
    %v270 = vsub.f32 %v141, %v248
    %v271 = vsub.f32 %v142, %v255
    %v272 = vmul.f32 %v256, 1.442695
    %v273 = vpow.pop %v272
    %v274 = vmul.f32 %v257, 1.442695
    %v275 = vpow.pop %v274
    %v276 = vmul.f32 %v258, 1.442695
    %v277 = vpow.pop %v276
    %v278 = vmul.f32 %v259, 1.442695
    %v279 = vpow.pop %v278
    %v280 = vmul.f32 %v260, 1.442695
    %v281 = vpow.pop %v280
    %v282 = vmul.f32 %v261, 1.442695
    %v283 = vpow.pop %v282
    %v284 = vmul.f32 %v262, 1.442695
    %v285 = vpow.pop %v284
    %v286 = vmul.f32 %v263, 1.442695
    %v287 = vpow.pop %v286
    %v288 = vmul.f32 %v264, 1.442695
    %v289 = vpow.pop %v288
    %v290 = vmul.f32 %v265, 1.442695
    %v291 = vpow.pop %v290
    %v292 = vmul.f32 %v266, 1.442695
    %v293 = vpow.pop %v292
    %v294 = vmul.f32 %v267, 1.442695
    %v295 = vpow.pop %v294
    %v296 = vmul.f32 %v268, 1.442695
    %v297 = vpow.pop %v296
    %v298 = vmul.f32 %v269, 1.442695
    %v299 = vpow.pop %v298
    %v300 = vmul.f32 %v270, 1.442695
    %v301 = vpow.pop %v300
    %v302 = vmul.f32 %v271, 1.442695
    %v303 = vpow.pop %v302
    %v320 = vrot.slane %v273, 1
    %v321 = vrot.slane %v275, 1
    %v322 = vrot.slane %v277, 1
    %v323 = vrot.slane %v279, 1
    %v324 = vrot.slane %v281, 1
    %v325 = vrot.slane %v283, 1
    %v326 = vrot.slane %v285, 1
    %v327 = vrot.slane %v287, 1
    %v328 = vrot.slane %v289, 1
    %v329 = vrot.slane %v291, 1
    %v330 = vrot.slane %v293, 1
    %v331 = vrot.slane %v295, 1
    %v332 = vrot.slane %v297, 1
    %v333 = vrot.slane %v299, 1
    %v334 = vrot.slane %v301, 1
    %v335 = vrot.slane %v303, 1
    %vm352 = vcmask 1046528
    %v353 = vsel %vm352, %v320, 0.0
    %v354 = vrot.slane %v353, 4
    %v355 = vadd.f32 %v353, %v354
    %v356 = vrot.slane %v355, 2
    %v357 = vadd.f32 %v355, %v356
    %v358 = vrot.slane %v357, 1
    %v359 = vadd.f32 %v357, %v358
    %v360 = vsel %vm352, %v321, 0.0
    %v361 = vrot.slane %v360, 4
    %v362 = vadd.f32 %v360, %v361
    %v363 = vrot.slane %v362, 2
    %v364 = vadd.f32 %v362, %v363
    %v365 = vrot.slane %v364, 1
    %v366 = vadd.f32 %v364, %v365
    %v367 = vsel %vm352, %v322, 0.0
    %v368 = vrot.slane %v367, 4
    %v369 = vadd.f32 %v367, %v368
    %v370 = vrot.slane %v369, 2
    %v371 = vadd.f32 %v369, %v370
    %v372 = vrot.slane %v371, 1
    %v373 = vadd.f32 %v371, %v372
    %v374 = vsel %vm352, %v323, 0.0
    %v375 = vrot.slane %v374, 4
    %v376 = vadd.f32 %v374, %v375
    %v377 = vrot.slane %v376, 2
    %v378 = vadd.f32 %v376, %v377
    %v379 = vrot.slane %v378, 1
    %v380 = vadd.f32 %v378, %v379
    %v381 = vsel %vm352, %v324, 0.0
    %v382 = vrot.slane %v381, 4
    %v383 = vadd.f32 %v381, %v382
    %v384 = vrot.slane %v383, 2
    %v385 = vadd.f32 %v383, %v384
    %v386 = vrot.slane %v385, 1
    %v387 = vadd.f32 %v385, %v386
    %v388 = vsel %vm352, %v325, 0.0
    %v389 = vrot.slane %v388, 4
    %v390 = vadd.f32 %v388, %v389
    %v391 = vrot.slane %v390, 2
    %v392 = vadd.f32 %v390, %v391
    %v393 = vrot.slane %v392, 1
    %v394 = vadd.f32 %v392, %v393
    %v395 = vsel %vm352, %v326, 0.0
    %v396 = vrot.slane %v395, 4
    %v397 = vadd.f32 %v395, %v396
    %v398 = vrot.slane %v397, 2
    %v399 = vadd.f32 %v397, %v398
    %v400 = vrot.slane %v399, 1
    %v401 = vadd.f32 %v399, %v400
    %v402 = vsel %vm352, %v327, 0.0
    %v403 = vrot.slane %v402, 4
    %v404 = vadd.f32 %v402, %v403
    %v405 = vrot.slane %v404, 2
    %v406 = vadd.f32 %v404, %v405
    %v407 = vrot.slane %v406, 1
    %v408 = vadd.f32 %v406, %v407
    %v409 = vsel %vm352, %v328, 0.0
    %v410 = vrot.slane %v409, 4
    %v411 = vadd.f32 %v409, %v410
    %v412 = vrot.slane %v411, 2
    %v413 = vadd.f32 %v411, %v412
    %v414 = vrot.slane %v413, 1
    %v415 = vadd.f32 %v413, %v414
    %v416 = vsel %vm352, %v329, 0.0
    %v417 = vrot.slane %v416, 4
    %v418 = vadd.f32 %v416, %v417
    %v419 = vrot.slane %v418, 2
    %v420 = vadd.f32 %v418, %v419
    %v421 = vrot.slane %v420, 1
    %v422 = vadd.f32 %v420, %v421
    %v423 = vsel %vm352, %v330, 0.0
    %v424 = vrot.slane %v423, 4
    %v425 = vadd.f32 %v423, %v424
    %v426 = vrot.slane %v425, 2
    %v427 = vadd.f32 %v425, %v426
    %v428 = vrot.slane %v427, 1
    %v429 = vadd.f32 %v427, %v428
    %v430 = vsel %vm352, %v331, 0.0
    %v431 = vrot.slane %v430, 4
    %v432 = vadd.f32 %v430, %v431
    %v433 = vrot.slane %v432, 2
    %v434 = vadd.f32 %v432, %v433
    %v435 = vrot.slane %v434, 1
    %v436 = vadd.f32 %v434, %v435
    %v437 = vsel %vm352, %v332, 0.0
    %v438 = vrot.slane %v437, 4
    %v439 = vadd.f32 %v437, %v438
    %v440 = vrot.slane %v439, 2
    %v441 = vadd.f32 %v439, %v440
    %v442 = vrot.slane %v441, 1
    %v443 = vadd.f32 %v441, %v442
    %v444 = vsel %vm352, %v333, 0.0
    %v445 = vrot.slane %v444, 4
    %v446 = vadd.f32 %v444, %v445
    %v447 = vrot.slane %v446, 2
    %v448 = vadd.f32 %v446, %v447
    %v449 = vrot.slane %v448, 1
    %v450 = vadd.f32 %v448, %v449
    %v451 = vsel %vm352, %v334, 0.0
    %v452 = vrot.slane %v451, 4
    %v453 = vadd.f32 %v451, %v452
    %v454 = vrot.slane %v453, 2
    %v455 = vadd.f32 %v453, %v454
    %v456 = vrot.slane %v455, 1
    %v457 = vadd.f32 %v455, %v456
    %v458 = vsel %vm352, %v335, 0.0
    %v459 = vrot.slane %v458, 4
    %v460 = vadd.f32 %v458, %v459
    %v461 = vrot.slane %v460, 2
    %v462 = vadd.f32 %v460, %v461
    %v463 = vrot.slane %v462, 1
    %v464 = vadd.f32 %v462, %v463
    %v465 = vrcp.pop %v359
    %v466 = vrcp.pop %v366
    %v467 = vrcp.pop %v373
    %v468 = vrcp.pop %v380
    %v469 = vrcp.pop %v387
    %v470 = vrcp.pop %v394
    %v471 = vrcp.pop %v401
    %v472 = vrcp.pop %v408
    %v473 = vrcp.pop %v415
    %v474 = vrcp.pop %v422
    %v475 = vrcp.pop %v429
    %v476 = vrcp.pop %v436
    %v477 = vrcp.pop %v443
    %v478 = vrcp.pop %v450
    %v479 = vrcp.pop %v457
    %v480 = vrcp.pop %v464
    %v481 = vmul.f32 %v359, %v465
    %v482 = vmul.f32 %v366, %v466
    %v483 = vmul.f32 %v373, %v467
    %v484 = vmul.f32 %v380, %v468
    %v485 = vmul.f32 %v387, %v469
    %v486 = vmul.f32 %v394, %v470
    %v487 = vmul.f32 %v401, %v471
    %v488 = vmul.f32 %v408, %v472
    %v489 = vmul.f32 %v415, %v473
    %v490 = vmul.f32 %v422, %v474
    %v491 = vmul.f32 %v429, %v475
    %v492 = vmul.f32 %v436, %v476
    %v493 = vmul.f32 %v443, %v477
    %v494 = vmul.f32 %v450, %v478
    %v495 = vmul.f32 %v457, %v479
    %v496 = vmul.f32 %v464, %v480
    %v497 = vsub.f32 2.0, %v481
    %v498 = vsub.f32 2.0, %v482
    %v499 = vsub.f32 2.0, %v483
    %v500 = vsub.f32 2.0, %v484
    %v501 = vsub.f32 2.0, %v485
    %v502 = vsub.f32 2.0, %v486
    %v503 = vsub.f32 2.0, %v487
    %v504 = vsub.f32 2.0, %v488
    %v505 = vsub.f32 2.0, %v489
    %v506 = vsub.f32 2.0, %v490
    %v507 = vsub.f32 2.0, %v491
    %v508 = vsub.f32 2.0, %v492
    %v509 = vsub.f32 2.0, %v493
    %v510 = vsub.f32 2.0, %v494
    %v511 = vsub.f32 2.0, %v495
    %v512 = vsub.f32 2.0, %v496
    %v513 = vmul.f32 %v465, %v497
    %v514 = vmul.f32 %v466, %v498
    %v515 = vmul.f32 %v467, %v499
    %v516 = vmul.f32 %v468, %v500
    %v517 = vmul.f32 %v469, %v501
    %v518 = vmul.f32 %v470, %v502
    %v519 = vmul.f32 %v471, %v503
    %v520 = vmul.f32 %v472, %v504
    %v521 = vmul.f32 %v473, %v505
    %v522 = vmul.f32 %v474, %v506
    %v523 = vmul.f32 %v475, %v507
    %v524 = vmul.f32 %v476, %v508
    %v525 = vmul.f32 %v477, %v509
    %v526 = vmul.f32 %v478, %v510
    %v527 = vmul.f32 %v479, %v511
    %v528 = vmul.f32 %v480, %v512
    %v529 = vmul.f32 %v127, %v513
    %v530 = vmul.f32 %v128, %v514
    %v531 = vmul.f32 %v129, %v515
    %v532 = vmul.f32 %v130, %v516
    %v533 = vmul.f32 %v131, %v517
    %v534 = vmul.f32 %v132, %v518
    %v535 = vmul.f32 %v133, %v519
    %v536 = vmul.f32 %v134, %v520
    %v537 = vmul.f32 %v135, %v521
    %v538 = vmul.f32 %v136, %v522
    %v539 = vmul.f32 %v137, %v523
    %v540 = vmul.f32 %v138, %v524
    %v541 = vmul.f32 %v139, %v525
    %v542 = vmul.f32 %v140, %v526
    %v543 = vmul.f32 %v141, %v527
    %v544 = vmul.f32 %v142, %v528
    %v561 = vcombine.low %v127, %v128
    %v562 = vcombine.low %v129, %v130
    %v563 = vcombine.low %v131, %v132
    %v564 = vcombine.low %v133, %v134
    %v566 = vunpack.c.l.s4 1966171168
    %v567 = vunpack.c.0.s8 %v566
    %v568 = vlaneseq
    %v569 = vshrl.u32 %v568, 7
    %v570 = vsub.s32 %v567, %v569
    %v571 = vrot.slane %v561, %v570
    %v573 = vunpack.c.l.s4 1966171168
    %v574 = vunpack.c.0.s8 %v573
    %v575 = vlaneseq
    %v576 = vshrl.u32 %v575, 7
    %v577 = vsub.s32 %v574, %v576
    %v578 = vrot.slane %v562, %v577
    %v580 = vunpack.c.l.s4 1966171168
    %v581 = vunpack.c.0.s8 %v580
    %v582 = vlaneseq
    %v583 = vshrl.u32 %v582, 7
    %v584 = vsub.s32 %v581, %v583
    %v585 = vrot.slane %v563, %v584
    %v587 = vunpack.c.l.s4 1966171168
    %v588 = vunpack.c.0.s8 %v587
    %v589 = vlaneseq
    %v590 = vshrl.u32 %v589, 7
    %v591 = vsub.s32 %v588, %v590
    %v592 = vrot.slane %v564, %v591
    %v593 = vcombine.low %v571, %v578
    %v594 = vcombine.low %v585, %v592
    %v596 = vunpack.c.l.s4 1966171168
    %v597 = vunpack.c.0.s8 %v596
    %v598 = vlaneseq
    %v599 = vshrl.u32 %v598, 7
    %v600 = vsub.s32 %v597, %v599
    %v601 = vrot.slane %v593, %v600
    %v603 = vunpack.c.l.s4 1966171168
    %v604 = vunpack.c.0.s8 %v603
    %v605 = vlaneseq
    %v606 = vshrl.u32 %v605, 7
    %v607 = vsub.s32 %v604, %v606
    %v608 = vrot.slane %v594, %v607
    %v609 = vcombine.low %v601, %v608
    %v610 = vcombine.low %v135, %v136
    %v611 = vcombine.low %v137, %v138
    %v612 = vcombine.low %v139, %v140
    %v613 = vcombine.low %v141, %v142
    %v615 = vunpack.c.l.s4 1966171168
    %v616 = vunpack.c.0.s8 %v615
    %v617 = vlaneseq
    %v618 = vshrl.u32 %v617, 7
    %v619 = vsub.s32 %v616, %v618
    %v620 = vrot.slane %v610, %v619
    %v622 = vunpack.c.l.s4 1966171168
    %v623 = vunpack.c.0.s8 %v622
    %v624 = vlaneseq
    %v625 = vshrl.u32 %v624, 7
    %v626 = vsub.s32 %v623, %v625
    %v627 = vrot.slane %v611, %v626
    %v629 = vunpack.c.l.s4 1966171168
    %v630 = vunpack.c.0.s8 %v629
    %v631 = vlaneseq
    %v632 = vshrl.u32 %v631, 7
    %v633 = vsub.s32 %v630, %v632
    %v634 = vrot.slane %v612, %v633
    %v636 = vunpack.c.l.s4 1966171168
    %v637 = vunpack.c.0.s8 %v636
    %v638 = vlaneseq
    %v639 = vshrl.u32 %v638, 7
    %v640 = vsub.s32 %v637, %v639
    %v641 = vrot.slane %v613, %v640
    %v642 = vcombine.low %v620, %v627
    %v643 = vcombine.low %v634, %v641
    %v645 = vunpack.c.l.s4 1966171168
    %v646 = vunpack.c.0.s8 %v645
    %v647 = vlaneseq
    %v648 = vshrl.u32 %v647, 7
    %v649 = vsub.s32 %v646, %v648
    %v650 = vrot.slane %v642, %v649
    %v652 = vunpack.c.l.s4 1966171168
    %v653 = vunpack.c.0.s8 %v652
    %v654 = vlaneseq
    %v655 = vshrl.u32 %v654, 7
    %v656 = vsub.s32 %v653, %v655
    %v657 = vrot.slane %v643, %v656
    %v658 = vcombine.low %v650, %v657
    %661 = vst [vmem:[#allocation2] ss:$8 sm:$0xf] %v609
    %662 = vst [vmem:[#allocation2] ss:$8 sm:$0xf0] %v609
    %s663 = scalar_lea.vmem [#allocation2], 64
    %664 = vst [vmem:[%s663] ss:$8 sm:$0xf] %v658
    %665 = vst [vmem:[%s663] ss:$8 sm:$0xf0] %v658
    %v666 = vlaneseq
    %v667 = vshrl.u32 %v666, 7
    %v668 = vsub.s32 0, %v667
    %v669 = vrot.slane %v529, %v668
    %v670 = vlaneseq
    %v671 = vshrl.u32 %v670, 7
    %v672 = vsub.s32 0, %v671
    %v673 = vrot.slane %v530, %v672
    %v674 = vlaneseq
    %v675 = vshrl.u32 %v674, 7
    %v676 = vsub.s32 0, %v675
    %v677 = vrot.slane %v531, %v676
    %v678 = vlaneseq
    %v679 = vshrl.u32 %v678, 7
    %v680 = vsub.s32 0, %v679
    %v681 = vrot.slane %v532, %v680
    %v682 = vlaneseq
    %v683 = vshrl.u32 %v682, 7
    %v684 = vsub.s32 0, %v683
    %v685 = vrot.slane %v533, %v684
    %v686 = vlaneseq
    %v687 = vshrl.u32 %v686, 7
    %v688 = vsub.s32 0, %v687
    %v689 = vrot.slane %v534, %v688
    %v690 = vlaneseq
    %v691 = vshrl.u32 %v690, 7
    %v692 = vsub.s32 0, %v691
    %v693 = vrot.slane %v535, %v692
    %v694 = vlaneseq
    %v695 = vshrl.u32 %v694, 7
    %v696 = vsub.s32 0, %v695
    %v697 = vrot.slane %v536, %v696
    %v698 = vlaneseq
    %v699 = vshrl.u32 %v698, 7
    %v700 = vsub.s32 0, %v699
    %v701 = vrot.slane %v537, %v700
    %v702 = vlaneseq
    %v703 = vshrl.u32 %v702, 7
    %v704 = vsub.s32 0, %v703
    %v705 = vrot.slane %v538, %v704
    %v706 = vlaneseq
    %v707 = vshrl.u32 %v706, 7
    %v708 = vsub.s32 0, %v707
    %v709 = vrot.slane %v539, %v708
    %v710 = vlaneseq
    %v711 = vshrl.u32 %v710, 7
    %v712 = vsub.s32 0, %v711
    %v713 = vrot.slane %v540, %v712
    %v714 = vlaneseq
    %v715 = vshrl.u32 %v714, 7
    %v716 = vsub.s32 0, %v715
    %v717 = vrot.slane %v541, %v716
    %v718 = vlaneseq
    %v719 = vshrl.u32 %v718, 7
    %v720 = vsub.s32 0, %v719
    %v721 = vrot.slane %v542, %v720
    %v722 = vlaneseq
    %v723 = vshrl.u32 %v722, 7
    %v724 = vsub.s32 0, %v723
    %v725 = vrot.slane %v543, %v724
    %v726 = vlaneseq
    %v727 = vshrl.u32 %v726, 7
    %v728 = vsub.s32 0, %v727
    %v729 = vrot.slane %v544, %v728
    %v730 = vmul.f32 %v273, %v669
    %v731 = vmul.f32 %v275, %v673
    %v732 = vmul.f32 %v277, %v677
    %v733 = vmul.f32 %v279, %v681
    %v734 = vmul.f32 %v281, %v685
    %v735 = vmul.f32 %v283, %v689
    %v736 = vmul.f32 %v285, %v693
    %v737 = vmul.f32 %v287, %v697
    %v738 = vmul.f32 %v289, %v701
    %v739 = vmul.f32 %v291, %v705
    %v740 = vmul.f32 %v293, %v709
    %v741 = vmul.f32 %v295, %v713
    %v742 = vmul.f32 %v297, %v717
    %v743 = vmul.f32 %v299, %v721
    %v744 = vmul.f32 %v301, %v725
    %v745 = vmul.f32 %v303, %v729
    %746 = vst [vmem:[#allocation2] sm:$0xfe] %v730
    %747 = vst [vmem:[#allocation2 + $0x8] sm:$0xfe] %v731
    %748 = vst [vmem:[#allocation2 + $0x10] sm:$0xfe] %v732
    %749 = vst [vmem:[#allocation2 + $0x18] sm:$0xfe] %v733
    %750 = vst [vmem:[#allocation2 + $0x20] sm:$0xfe] %v734
    %751 = vst [vmem:[#allocation2 + $0x28] sm:$0xfe] %v735
    %752 = vst [vmem:[#allocation2 + $0x30] sm:$0xfe] %v736
    %753 = vst [vmem:[#allocation2 + $0x38] sm:$0xfe] %v737
    %754 = vst [vmem:[#allocation2 + $0x40] sm:$0xfe] %v738
    %755 = vst [vmem:[#allocation2 + $0x48] sm:$0xfe] %v739
    %756 = vst [vmem:[#allocation2 + $0x50] sm:$0xfe] %v740
    %757 = vst [vmem:[#allocation2 + $0x58] sm:$0xfe] %v741
    %758 = vst [vmem:[#allocation2 + $0x60] sm:$0xfe] %v742
    %759 = vst [vmem:[#allocation2 + $0x68] sm:$0xfe] %v743
    %760 = vst [vmem:[#allocation2 + $0x70] sm:$0xfe] %v744
    %761 = vst [vmem:[#allocation2 + $0x78] sm:$0xfe] %v745
    // Predicated region
    $region14: #{tpu_custom_call.1} parent=1 // pred_check
      _
    $region15: #{tpu_custom_call.1} parent=1 // pred_check_branch
      %763 = sbr.rel (0) target = $region17
    $region16: #{tpu_custom_call.1} parent=1 // pred_region
      %s765 = ssub.s32 2048, 2048
      %766 = vsyncadd [#allocation3], %s765
      %s768 = sshll.u32 [#allocation2], 4
      %s769 = int_to_ptr.vmem [resolvable:$true] %s768
      %771 = dma.vmem_to_hbm [thread:$0]  %s769, 2048, %s3, [#allocation3]
    $region17: #{tpu_custom_call.1} parent=1 // pred_fallthru
      _
    // Predicated region
    $region18: #{tpu_custom_call.1} parent=1 // pred_check
      _
    $region19: #{tpu_custom_call.1} parent=1 // pred_check_branch
      %773 = sbr.rel (0) target = $region21
    $region20: #{tpu_custom_call.1} parent=1 // pred_region
      %774 = dma.done [#allocation3], 2048
    $region21: #{tpu_custom_call.1} parent=1 // pred_fallthru
      _
    %775 = vsyncpa [#allocation3], 1

</llo_original>
